<compile_context>
chip_gen: v7x
topology: tpu7x:2x2x1
jax: 0.10.0
libtpu: 0.0.40
codegen_flags: <defaults>
</compile_context>

<pallas_src>
import functools

import jax
import jax.numpy as jnp
from jax.experimental import pallas as pl
from jax.experimental.pallas import tpu as pltpu

_NEG_BIG = -1e30          # finite "minus infinity" for padded logit columns
_VMEM_LIMIT = 32 * 1024 * 1024


# ----------------------------------------------------------------------------
# Pallas kernel: fused GroupModel forward (eval path) for one block of rows.
# ----------------------------------------------------------------------------
def _group_model_kernel(x_ref, w1t_ref, b1_ref, t_ref, *out_refs,
                        compute_dtype, with_one_hot):
    if with_one_hot:
        oh_ref, out_ref, ent_ref = out_refs
    else:
        out_ref, ent_ref = out_refs

    # In-kernel cast: keeps x traffic at a single HBM read (no wrapper cast).
    x = x_ref[...].astype(compute_dtype)                         # (BM, H)

    # logits = x @ W1.T + b1  (W1 pre-transposed + G-padded offline -> (H, Gp))
    logits = jnp.dot(x, w1t_ref[...],
                     preferred_element_type=jnp.float32) + b1_ref[...]
    Gp = logits.shape[-1]

    # one_hot = onehot_max(logits): first argmax index (torch.max tie rule).
    # Padded columns carry bias -1e30 and can never win.
    max_val = jnp.max(logits, axis=-1, keepdims=True)
    iota = jax.lax.broadcasted_iota(jnp.int32, logits.shape, 1)
    is_max = logits >= max_val
    first_idx = jnp.min(jnp.where(is_max, iota, Gp), axis=-1, keepdims=True)
    one_hot = (iota == first_idx).astype(jnp.float32)

    # entropic_loss = sum(p * log p, -1) = sum(e*shifted)/denom - log(denom)
    # (exp(pad) == 0, so padded lanes contribute nothing).  All f32.
    shifted = logits - max_val
    e = jnp.exp(shifted)
    denom = jnp.sum(e, axis=-1, keepdims=True)
    inv_denom = pl.reciprocal(denom)                 # exact; EUP slot
    ent = (jnp.sum(e * shifted, axis=-1, keepdims=True) * inv_denom
           - jnp.log(denom))                                      # (BM, 1)
    ent_ref[...] = ent

    # output = relu(fwd_func_3(fwd_func_2(one_hot))) == one_hot @ T
    # with T = relu((W3 @ W2).T + b3) precomputed offline (exact row-select).
    out = jnp.dot(one_hot.astype(t_ref.dtype), t_ref[...],
                  preferred_element_type=jnp.float32)
    out_ref[...] = out.astype(out_ref.dtype)

    if with_one_hot:
        oh_ref[...] = one_hot


# ----------------------------------------------------------------------------
# Tiling helpers.
# ----------------------------------------------------------------------------
def _min_parallel_blocks():
    """Only v7x has 2 TensorCores worth sharding the parallel grid across."""
    try:
        kind = jax.devices()[0].device_kind.lower()
        if "v7" in kind:
            return 2
    except Exception:
        pass
    return 1


def _pick_block_rows(batch, requested, bytes_per_row, weight_bytes, *,
                     vmem_budget=20 << 20, min_blocks=1):
    """Row tile sized against a double-buffered VMEM budget.

    Prefers one full-extent block when the whole batch fits (no divisibility
    constraint in that case); otherwise multiple-of-16 tiles (bf16-friendly).
    """
    if batch <= 8:
        return batch                                  # single full-extent block
    budget = max(1 << 20, vmem_budget - 2 * weight_bytes)
    max_rows = max(16, budget // max(1, 2 * bytes_per_row))
    if min_blocks <= 1 and batch <= min(requested, max_rows):
        return batch                                  # single full-extent block
    bm = min(requested, batch, max_rows)
    if min_blocks > 1 and batch >= 32:                # v7x: shard across 2 TCs
        bm = min(bm, -(-batch // min_blocks))
    mult = 16 if bm >= 16 else 8
    bm = max(8, (bm // mult) * mult)
    return bm


# ----------------------------------------------------------------------------
# Wrapper: GroupModel.forward (eval mode).
# ----------------------------------------------------------------------------
def group_model_forward(x, params, *, block_rows=1024,
                        compute_dtype=jnp.bfloat16, out_dtype=None,
                        return_one_hot=False):
    """GroupModel.forward (eval mode). x: (B, H).

    Returns (one_hot (B,G) if requested, output (B,H), entropic_loss (B,)).
    `out_dtype` defaults to `compute_dtype` (lossless in the bf16 path since
    the output rows are selected from a bf16 table); pass jnp.float32 for
    strict f32 output.
    """
    # TODO(synk): training path uses hard gumbel_softmax (random sampling); only
    # the deterministic eval path (onehot_max) is implemented here.
    B, H = x.shape
    w1, b1, w2, w3, b3 = params            # (G,H),(1,G),(H,G),(H,H),(1,H)
    G = w1.shape[0]
    if out_dtype is None:
        out_dtype = compute_dtype

    Gp = ((G + 127) // 128) * 128          # lane-dense group dimension
    pad = Gp - G

    # One-time XLA-side weight prep (layout plumbing, outside the kernel):
    #   * fold W3@W2, b3 and the ReLU into a (G,H) table (exact for one-hot),
    #   * pre-transpose + pad G to Gp (pad bias -1e30, pad table rows 0),
    #   * cast matmul operands to the compute dtype; bias stays f32.
    w1f = jnp.asarray(w1, jnp.float32)
    b1f = jnp.asarray(b1, jnp.float32).reshape(1, G)
    w2f = jnp.asarray(w2, jnp.float32)
    w3f = jnp.asarray(w3, jnp.float32)
    b3f = jnp.asarray(b3, jnp.float32).reshape(1, H)

    w1t = jnp.pad(w1f.T, ((0, 0), (0, pad))).astype(compute_dtype)    # (H, Gp)
    b1p = jnp.pad(b1f, ((0, 0), (0, pad)),
                  constant_values=_NEG_BIG)                           # (1, Gp)
    table = jnp.maximum((w3f @ w2f).T + b3f, 0.0)                     # (G, H)
    tpad = jnp.pad(table, ((0, pad), (0, 0))).astype(compute_dtype)   # (Gp, H)

    cd_bytes = jnp.dtype(compute_dtype).itemsize
    bytes_per_row = (H * jnp.dtype(x.dtype).itemsize
                     + H * jnp.dtype(out_dtype).itemsize + 4
                     + (Gp * 4 if return_one_hot else 0))
    weight_bytes = 2 * H * Gp * cd_bytes + Gp * 4 + H * 4
    bm = _pick_block_rows(B, block_rows, bytes_per_row, weight_bytes,
                          min_blocks=_min_parallel_blocks())
    grid = (pl.cdiv(B, bm),)

    out_shapes = [jax.ShapeDtypeStruct((B, H), out_dtype),
                  jax.ShapeDtypeStruct((B, 1), jnp.float32)]
    out_specs = [pl.BlockSpec((bm, H), lambda i: (i, 0)),
                 pl.BlockSpec((bm, 1), lambda i: (i, 0))]
    if return_one_hot:
        out_shapes.insert(0, jax.ShapeDtypeStruct((B, Gp), jnp.float32))
        out_specs.insert(0, pl.BlockSpec((bm, Gp), lambda i: (i, 0)))

    kernel = functools.partial(_group_model_kernel,
                               compute_dtype=compute_dtype,
                               with_one_hot=return_one_hot)

    # TODO(synk): for very large H (or G >> 128) tile H (the output N dim) with
    # an extra grid axis instead of one full-H block.
    results = pl.pallas_call(
        kernel,
        out_shape=tuple(out_shapes),
        grid_spec=pltpu.PrefetchScalarGridSpec(
            num_scalar_prefetch=0,
            grid=grid,
            in_specs=[
                pl.BlockSpec((bm, H), lambda i: (i, 0)),   # x rows (orig dtype)
                pl.BlockSpec((H, Gp), lambda i: (0, 0)),   # W1.T (padded)
                pl.BlockSpec((1, Gp), lambda i: (0, 0)),   # b1 (f32, padded)
                pl.BlockSpec((Gp, H), lambda i: (0, 0)),   # relu((W3W2).T + b3)
            ],
            out_specs=out_specs,
        ),
        compiler_params=pltpu.CompilerParams(
            dimension_semantics=("parallel",),
            vmem_limit_bytes=_VMEM_LIMIT),
    )(x, w1t, b1p, tpad)

    if return_one_hot:
        one_hot, output, ent = results
        return one_hot[:, :G], output, ent[:, 0]
    output, ent = results
    return output, ent[:, 0]


# ----------------------------------------------------------------------------
# Glue: deterministic parameter init + stand-in encoders + BiEncoder wiring.
# ----------------------------------------------------------------------------
def make_group_model_params(key, num_group, hidden_dim):
    k1, k2, k3, k4, k5 = jax.random.split(key, 5)
    w1 = 0.02 * jax.random.normal(k1, (num_group, hidden_dim), jnp.float32)
    b1 = 0.02 * jax.random.normal(k2, (1, num_group), jnp.float32)
    w2 = 0.02 * jax.random.normal(k3, (hidden_dim, num_group), jnp.float32)
    w3 = 0.02 * jax.random.normal(k4, (hidden_dim, hidden_dim), jnp.float32)
    b3 = 0.02 * jax.random.normal(k5, (1, hidden_dim), jnp.float32)
    return (w1, b1, w2, w3, b3)


def encoder_pooled(ids, emb_table, w_pool, b_pool, representation_token_pos=0):
    # TODO(synk): the real question_model / ctx_model are external BERT-style
    # encoders (not defined in this file); this is a deterministic stand-in that
    # produces the [B, H] pooled representation they would return.
    tok = emb_table[ids[:, representation_token_pos]]            # (B, H)
    return jnp.tanh(tok @ w_pool.T + b_pool)


def group_biencoder_forward(question_ids, context_ids, enc_params,
                            q_gp_params, ctx_gp_params, *,
                            compute_dtype=jnp.bfloat16):
    emb, wq, bq, wc, bc = enc_params
    q_pooled_out = encoder_pooled(question_ids, emb, wq, bq)
    gp_q_out, q_entropy_loss = group_model_forward(
        q_pooled_out, q_gp_params, compute_dtype=compute_dtype)

    ctx_pooled_out = encoder_pooled(context_ids, emb, wc, bc)
    gp_ctx_out, ctx_entropy_loss = group_model_forward(
        ctx_pooled_out, ctx_gp_params, compute_dtype=compute_dtype)

    entropy_loss = jnp.concatenate([q_entropy_loss, ctx_entropy_loss])
    return q_pooled_out, ctx_pooled_out, entropy_loss, gp_q_out, gp_ctx_out


# Pure-JAX reference of the GroupModel head (unfused two-matmul form, matching
# the PyTorch module). compute_dtype mimics the kernel's input/weight cast.
def _group_model_ref(x, params, compute_dtype=jnp.float32):
    w1, b1, w2, w3, b3 = params
    xq = x.astype(compute_dtype)
    logits = jnp.dot(xq, w1.astype(compute_dtype).T,
                     preferred_element_type=jnp.float32) + b1.reshape(1, -1)
    idx = jnp.argmax(logits, axis=-1)
    one_hot = jax.nn.one_hot(idx, logits.shape[-1], dtype=jnp.float32)
    p = jax.nn.softmax(logits, axis=-1)
    logp = jax.nn.log_softmax(logits, axis=-1)
    ent = jnp.sum(p * logp, axis=-1)
    h2 = jnp.dot(one_hot.astype(compute_dtype), w2.astype(compute_dtype).T,
                 preferred_element_type=jnp.float32)
    out = jnp.dot(h2.astype(compute_dtype), w3.astype(compute_dtype).T,
                  preferred_element_type=jnp.float32) + b3.reshape(1, -1)
    return one_hot, jnp.maximum(out, 0.0), ent


if __name__ == "__main__":
    key = jax.random.PRNGKey(0)
    B, S, H, VOCAB = 8, 8, 32, 50
    NUM_Q_GROUP, NUM_CTX_GROUP = 8, 16

    ks = jax.random.split(key, 10)
    question_ids = jax.random.randint(ks[0], (B, S), 0, VOCAB, dtype=jnp.int32)
    context_ids = jax.random.randint(ks[1], (B, S), 0, VOCAB, dtype=jnp.int32)

    emb = 0.5 * jax.random.normal(ks[2], (VOCAB, H), jnp.float32)
    wq = 0.2 * jax.random.normal(ks[3], (H, H), jnp.float32)
    bq = 0.02 * jax.random.normal(ks[4], (H,), jnp.float32)
    wc = 0.2 * jax.random.normal(ks[5], (H, H), jnp.float32)
    bc = 0.02 * jax.random.normal(ks[6], (H,), jnp.float32)
    enc_params = (emb, wq, bq, wc, bc)

    q_gp_params = make_group_model_params(ks[7], NUM_Q_GROUP, H)
    ctx_gp_params = make_group_model_params(ks[8], NUM_CTX_GROUP, H)

    # Full bi-encoder forward (default bf16 compute path).
    outs = group_biencoder_forward(question_ids, context_ids, enc_params,
                                   q_gp_params, ctx_gp_params)
    outs = jax.block_until_ready(outs)
    q_pooled, ctx_pooled, entropy_loss, gp_q_out, gp_ctx_out = outs

    assert entropy_loss.shape == (2 * B,)
    assert gp_q_out.shape == (B, H) and gp_ctx_out.shape == (B, H)
    assert bool(jnp.all(jnp.isfinite(entropy_loss)))
    assert bool(jnp.all(jnp.isfinite(gp_q_out.astype(jnp.float32))))
    assert bool(jnp.all(jnp.isfinite(gp_ctx_out.astype(jnp.float32))))

    # 1) f32 kernel path vs the unfused pure-JAX reference (tight tolerance;
    #    also validates the W3@W2/b3/relu fold, G padding and argmax ties).
    oh_k, out_k, ent_k = group_model_forward(
        q_pooled, q_gp_params, compute_dtype=jnp.float32, return_one_hot=True)
    oh_r, out_r, ent_r = _group_model_ref(q_pooled, q_gp_params,
                                          compute_dtype=jnp.float32)
    assert jnp.allclose(oh_k, oh_r)
    assert jnp.allclose(out_k, out_r, atol=1e-5)
    assert jnp.allclose(ent_k, ent_r, atol=1e-5)

    # 2) Default bf16 kernel path vs a bf16-consistent reference.
    out_kb, ent_kb = group_model_forward(ctx_pooled, ctx_gp_params)
    _, out_rb, ent_rb = _group_model_ref(ctx_pooled, ctx_gp_params,
                                         compute_dtype=jnp.bfloat16)
    assert jnp.allclose(out_kb.astype(jnp.float32), out_rb, atol=1e-3)
    assert jnp.allclose(ent_kb, ent_rb, atol=1e-3)

    print("KERNEL_OK")
</pallas_src>

<mosaic_0001>
module attributes {stable_mosaic.version = 11 : i64} {
  func.func @_group_model_kernel(%arg0: i32, %arg1: memref<8x32xf32, #tpu.memory_space<vmem>>, %arg2: memref<32x128xbf16, #tpu.memory_space<vmem>>, %arg3: memref<1x128xf32, #tpu.memory_space<vmem>>, %arg4: memref<128x32xbf16, #tpu.memory_space<vmem>>, %arg5: memref<8x32xbf16, #tpu.memory_space<vmem>>, %arg6: memref<8x1xf32, #tpu.memory_space<vmem>>) attributes {dimension_semantics = [#tpu.dimension_semantics<parallel>], iteration_bounds = array<i64: 1>, scalar_prefetch = 0 : i64, scratch_operands = 0 : i64, tpu.core_type = #tpu.core_type<tc>, window_params = [{transform_indices = @transform_0, window_bounds = array<i64: 8, 32>}, {pipeline_mode = #tpu.pipeline_mode<synchronous>, transform_indices = @transform_1, window_bounds = array<i64: 32, 128>}, {pipeline_mode = #tpu.pipeline_mode<synchronous>, transform_indices = @transform_2, window_bounds = array<i64: 1, 128>}, {pipeline_mode = #tpu.pipeline_mode<synchronous>, transform_indices = @transform_3, window_bounds = array<i64: 128, 32>}, {transform_indices = @transform_4, window_bounds = array<i64: 8, 32>}, {transform_indices = @transform_5, window_bounds = array<i64: 8, 1>}]} {
    %c0 = arith.constant 0 : index
    %c0_0 = arith.constant 0 : index
    %0 = vector.load %arg1[%c0, %c0_0] : memref<8x32xf32, #tpu.memory_space<vmem>>, vector<8x32xf32>
    %1 = arith.truncf %0 : vector<8x32xf32> to vector<8x32xbf16>
    %c0_1 = arith.constant 0 : index
    %c0_2 = arith.constant 0 : index
    %2 = vector.load %arg2[%c0_1, %c0_2] : memref<32x128xbf16, #tpu.memory_space<vmem>>, vector<32x128xbf16>
    %cst = arith.constant dense<0.000000e+00> : vector<8x128xf32>
    %3 = tpu.matmul %1, %2, %cst {dimension_numbers = #tpu.dot_dimension_numbers<[1], [0], [0], [1], [0, 0, 1, 1], [], []>} : vector<8x32xbf16>, vector<32x128xbf16>, vector<8x128xf32> -> vector<8x128xf32>
    %c0_3 = arith.constant 0 : index
    %c0_4 = arith.constant 0 : index
    %4 = vector.load %arg3[%c0_3, %c0_4] : memref<1x128xf32, #tpu.memory_space<vmem>>, vector<1x128xf32>
    %5 = vector.broadcast %4 : vector<1x128xf32> to vector<8x128xf32>
    %6 = arith.addf %3, %5 : vector<8x128xf32>
    %cst_5 = arith.constant dense<0xFF800000> : vector<8xf32>
    %7 = vector.multi_reduction <maximumf>, %6, %cst_5 [1] : vector<8x128xf32> to vector<8xf32>
    %8 = vector.shape_cast %7 : vector<8xf32> to vector<8x1xf32>
    %9 = tpu.iota {dimensions = array<i32: 1>} : vector<8x128xi32>
    %10 = vector.broadcast %8 : vector<8x1xf32> to vector<8x128xf32>
    %11 = arith.cmpf oge, %6, %10 : vector<8x128xf32>
    %c128_i32 = arith.constant 128 : i32
    %12 = vector.broadcast %c128_i32 : i32 to vector<8x128xi32>
    %13 = arith.select %11, %9, %12 : vector<8x128xi1>, vector<8x128xi32>
    %cst_6 = arith.constant dense<2147483647> : vector<8xi32>
    %14 = vector.multi_reduction <minsi>, %13, %cst_6 [1] : vector<8x128xi32> to vector<8xi32>
    %15 = vector.shape_cast %14 : vector<8xi32> to vector<8x1xi32>
    %16 = vector.broadcast %15 : vector<8x1xi32> to vector<8x128xi32>
    %17 = arith.cmpi eq, %9, %16 : vector<8x128xi32>
    %18 = arith.extui %17 : vector<8x128xi1> to vector<8x128xi32>
    %19 = arith.sitofp %18 : vector<8x128xi32> to vector<8x128xf32>
    %20 = vector.broadcast %8 : vector<8x1xf32> to vector<8x128xf32>
    %21 = arith.subf %6, %20 : vector<8x128xf32>
    %22 = math.exp %21 : vector<8x128xf32>
    %cst_7 = arith.constant dense<0.000000e+00> : vector<8xf32>
    %23 = vector.multi_reduction <add>, %22, %cst_7 [1] : vector<8x128xf32> to vector<8xf32>
    %24 = vector.shape_cast %23 : vector<8xf32> to vector<8x1xf32>
    %25 = tpu.reciprocal %24 : vector<8x1xf32> -> vector<8x1xf32>
    %26 = arith.mulf %22, %21 : vector<8x128xf32>
    %cst_8 = arith.constant dense<0.000000e+00> : vector<8xf32>
    %27 = vector.multi_reduction <add>, %26, %cst_8 [1] : vector<8x128xf32> to vector<8xf32>
    %28 = vector.shape_cast %27 : vector<8xf32> to vector<8x1xf32>
    %29 = arith.mulf %28, %25 : vector<8x1xf32>
    %30 = math.log %24 : vector<8x1xf32>
    %31 = arith.subf %29, %30 : vector<8x1xf32>
    %c0_9 = arith.constant 0 : index
    %c0_10 = arith.constant 0 : index
    %32 = vector.load %arg6[%c0_9, %c0_10] : memref<8x1xf32, #tpu.memory_space<vmem>>, vector<8x1xf32>
    tpu.vector_store %arg6[%c0_9, %c0_10], %31 {strides = array<i32>} : memref<8x1xf32, #tpu.memory_space<vmem>>, vector<8x1xf32>,
    %33 = arith.truncf %19 : vector<8x128xf32> to vector<8x128xbf16>
    %c0_11 = arith.constant 0 : index
    %c0_12 = arith.constant 0 : index
    %34 = vector.load %arg4[%c0_11, %c0_12] : memref<128x32xbf16, #tpu.memory_space<vmem>>, vector<128x32xbf16>
    %cst_13 = arith.constant dense<0.000000e+00> : vector<8x32xf32>
    %35 = tpu.matmul %33, %34, %cst_13 {dimension_numbers = #tpu.dot_dimension_numbers<[1], [0], [0], [1], [0, 0, 1, 1], [], []>} : vector<8x128xbf16>, vector<128x32xbf16>, vector<8x32xf32> -> vector<8x32xf32>
    %36 = arith.truncf %35 : vector<8x32xf32> to vector<8x32xbf16>
    %c0_14 = arith.constant 0 : index
    %c0_15 = arith.constant 0 : index
    %37 = vector.load %arg5[%c0_14, %c0_15] : memref<8x32xbf16, #tpu.memory_space<vmem>>, vector<8x32xbf16>
    tpu.vector_store %arg5[%c0_14, %c0_15], %36 {strides = array<i32>} : memref<8x32xbf16, #tpu.memory_space<vmem>>, vector<8x32xbf16>,
    return
  }
  func.func @transform_0(%arg0: i32) -> (i32, i32) {
    %c0_i32 = arith.constant 0 : i32
    %c0_i32_0 = arith.constant 0 : i32
    return %arg0, %c0_i32 : i32, i32
  }
  func.func @transform_1(%arg0: i32) -> (i32, i32) {
    %c0_i32 = arith.constant 0 : i32
    %c0_i32_0 = arith.constant 0 : i32
    %c0_i32_1 = arith.constant 0 : i32
    return %c0_i32, %c0_i32_0 : i32, i32
  }
  func.func @transform_2(%arg0: i32) -> (i32, i32) {
    %c0_i32 = arith.constant 0 : i32
    %c0_i32_0 = arith.constant 0 : i32
    %c0_i32_1 = arith.constant 0 : i32
    return %c0_i32, %c0_i32_0 : i32, i32
  }
  func.func @transform_3(%arg0: i32) -> (i32, i32) {
    %c0_i32 = arith.constant 0 : i32
    %c0_i32_0 = arith.constant 0 : i32
    %c0_i32_1 = arith.constant 0 : i32
    return %c0_i32, %c0_i32_0 : i32, i32
  }
  func.func @transform_4(%arg0: i32) -> (i32, i32) {
    %c0_i32 = arith.constant 0 : i32
    %c0_i32_0 = arith.constant 0 : i32
    return %arg0, %c0_i32 : i32, i32
  }
  func.func @transform_5(%arg0: i32) -> (i32, i32) {
    %c0_i32 = arith.constant 0 : i32
    %c0_i32_0 = arith.constant 0 : i32
    return %arg0, %c0_i32 : i32, i32
  }
}

</mosaic_0001>

<llo_original>
// kernel: tpu_custom_call.1
$region0: #{tpu_custom_call.1}
  #allocation0 [shape = 'u32[]', space=smem, size = 0x4, offset = 0x4, fixed_abs, tag = 'smem constant byte address 0x4 - core index']
  #allocation1 [shape = 'u32[144,128]{1,0:T(1,128)}', space=vmem, size = 0x12000, scoped, tag = 'internal scratch']
  %s0 = inlined_call_operand.vmem [shape: f32[8,32], index: 0, kind: input, shape index: {}]
  %s1 = inlined_call_operand.vmem [shape: bf16[32,128], index: 1, kind: input, shape index: {}]
  %s2 = inlined_call_operand.vmem [shape: f32[1,128], index: 2, kind: input, shape index: {}]
  %s3 = inlined_call_operand.vmem [shape: bf16[128,32], index: 3, kind: input, shape index: {}]
  %s4 = inlined_call_operand.hbm [shape: bf16[8,32], index: 4, kind: output, shape index: {0}]
  %s5 = inlined_call_operand.vmem [shape: f32[8,1], index: 5, kind: output, shape index: {1}]
  %6 = xla_tuple %s4, %s5
  %s7 = sld [smem:[#allocation0]]
  $region34: #{tpu_custom_call.1} parent=0
    _
  %s9 = ssub.s32 1, %s7
  %s10 = scalar_select 0, %s9, %s7
  $region1: #{tpu_custom_call.1} parent=0
    #allocation2 [shape = 'u8[2048]{0}', space=vmem, size = 0x800, scoped, tag = 'output window, operand 0, single buffered']
    #allocation3 [shape = 's32[1]{0}', space=sflag, size = 0x4, scoped, tag = 'scoped memory for tpu_custom_call.1']
    %11 = vsyncpa [#allocation3], 0
    // Predicated region
    $region2: #{tpu_custom_call.1} parent=1 // pred_check
      _
    $region3: #{tpu_custom_call.1} parent=1 // pred_check_branch
      %13 = sbr.rel (0) target = $region5
    $region4: #{tpu_custom_call.1} parent=1 // pred_region
      _
    $region5: #{tpu_custom_call.1} parent=1 // pred_fallthru
      _
    // Predicated region
    $region6: #{tpu_custom_call.1} parent=1 // pred_check
      _
    $region7: #{tpu_custom_call.1} parent=1 // pred_check_branch
      %15 = sbr.rel (0) target = $region9
    $region8: #{tpu_custom_call.1} parent=1 // pred_region
      _
    $region9: #{tpu_custom_call.1} parent=1 // pred_fallthru
      _
    // Predicated region
    $region10: #{tpu_custom_call.1} parent=1 // pred_check
      _
    $region11: #{tpu_custom_call.1} parent=1 // pred_check_branch
      %17 = sbr.rel (0) target = $region13
    $region12: #{tpu_custom_call.1} parent=1 // pred_region
      _
    $region13: #{tpu_custom_call.1} parent=1 // pred_fallthru
      _
    // Predicated region
    $region14: #{tpu_custom_call.1} parent=1 // pred_check
      _
    $region15: #{tpu_custom_call.1} parent=1 // pred_check_branch
      %19 = sbr.rel (0) target = $region17
    $region16: #{tpu_custom_call.1} parent=1 // pred_region
      _
    $region17: #{tpu_custom_call.1} parent=1 // pred_fallthru
      _
    %v21 = vld [vmem:[%s0] sm:$0xff]
    %v22 = vpack.c.bf16 %v21, %v21
    %v23 = vld [vmem:[%s1] sm:$0xf]
    %v24 = vld [vmem:[%s1 + $0x4] sm:$0xf]
    %v25 = vld [vmem:[%s1 + $0x8] sm:$0xf]
    %v26 = vld [vmem:[%s1 + $0xc] sm:$0xf]
    %v27 = vld [vmem:[%s2] sm:$0x1]
    %v29 = vlaneseq
    %v30 = vshrl.u32 %v29, 7
    %v31 = vsub.s32 0, %v30
    %v32 = vrot.slane %v27, %v31
    %v38 = vunpack.c.l.b16 %v23
    %v39 = vunpack.c.l.b16 %v24
    %v40 = vunpack.c.l.b16 %v25
    %v41 = vunpack.c.l.b16 %v26
    %v42 = vpack.c.b16 %v39, %v38
    %v43 = vpack.c.b16 %v41, %v40
    %vm46 = vcmask 261120
    %v48 = vsel %vm46, %v22, 0
    %50 = vmatprep.subr.bf16.mxu0 0
    %51 = vmatpush1.bf16.msra.mxu0 %v42
    %52 = vmatprep.subr.bf16.mxu0 0
    %53 = vmatpush1.bf16.msra.mxu0 %v43
    %54 = vmatprep.subr.bf16.mxu0 0
    %55 = vmatpush1.bf16.msra.mxu0 0
    %56 = vmatprep.subr.bf16.mxu0 0
    %57 = vmatpush1.bf16.msra.mxu0 0
    %58 = vmatprep.subr.bf16.mxu0 0
    %59 = vmatpush1.bf16.msra.mxu0 0
    %60 = vmatprep.subr.bf16.mxu0 0
    %61 = vmatpush1.bf16.msra.mxu0 0
    %62 = vmatprep.subr.bf16.mxu0 0
    %63 = vmatpush1.bf16.msra.mxu0 0
    %64 = vmatprep.subr.bf16.mxu0 0
    %65 = vmatpush1.bf16.msra.mxu0 0
    %66 = vmatprep.subr.bf16.mxu0 0
    %67 = vmatpush1.bf16.msra.mxu0 0
    %68 = vmatprep.subr.bf16.mxu0 0
    %69 = vmatpush1.bf16.msra.mxu0 0
    %70 = vmatprep.subr.bf16.mxu0 0
    %71 = vmatpush1.bf16.msra.mxu0 0
    %72 = vmatprep.subr.bf16.mxu0 0
    %73 = vmatpush1.bf16.msra.mxu0 0
    %74 = vmatprep.subr.bf16.mxu0 0
    %75 = vmatpush1.bf16.msra.mxu0 0
    %76 = vmatprep.subr.bf16.mxu0 0
    %77 = vmatpush1.bf16.msra.mxu0 0
    %78 = vmatprep.subr.bf16.mxu0 0
    %79 = vmatpush1.bf16.msra.mxu0 0
    %80 = vmatprep.subr.bf16.mxu0 0
    %81 = vmatpush1.bf16.msra.mxu0 0
    %82 = vmatprep.mubr.bf16.mxu0 0
    %83 = vmatmul.mubr.bf16.gmra.mrb[0].mxu0 %v48
    %v84 = vpop.f32.mrb[0].mxu0
    %v85 = vadd.f32 %v32, %v84
    %v86 = vpop.f32.mrb[0].mxu0
    %v87 = vpop.f32.mrb[0].mxu0
    %v88 = vpop.f32.mrb[0].mxu0
    %89 = vdwg.mxu0
    %90 = vmax.xlane.f32.xlu0 %v85
    %v91 = vpop.xlane.xlu0 %90
    %v92 = vlaneseq
    %v93 = vand.u32 %v92, 127
    %vm94 = vcmp.ge.f32.partialorder %v85, %v91
    %v95 = vsel %vm94, %v93, 128
    %v96 = vand.u32 %v95, 65535
    %v97 = vshra.s32 %v95, 16
    %v98 = vcvt.s32.f32 %v96
    %v99 = vcvt.s32.f32 %v97
    %100 = vmin.xlane.f32.xlu0 %v99
    %v101 = vpop.xlane.xlu0 %100
    %vm102 = vcmp.eq.f32.partialorder %v99, %v101
    %v103 = vsel %vm102, %v98, inf
    %104 = vmin.xlane.f32.xlu0 %v103
    %v105 = vpop.xlane.xlu0 %104
    %v106 = vcvt.f32.s32 %v105
    %v107 = vcvt.f32.s32 %v101
    %v108 = vshll.u32 %v107, 16
    %v109 = vadd.s32 %v108, %v106
    %vm110 = vcmp.eq.s32.totalorder %v93, %v109
    %v111 = vsub.f32 %v85, %v91
    %v112 = vmul.f32 %v111, 1.442695
    %v113 = vpow.pop %v112
    %114 = vadd.xlane.f32.xlu0 %v113
    %v115 = vpop.xlane.xlu0 %114
    %v116 = vrcp.pop %v115
    %v117 = vmul.f32 %v113, %v111
    %118 = vadd.xlane.f32.xlu0 %v117
    %v119 = vpop.xlane.xlu0 %118
    %v120 = vmul.f32 %v119, %v116
    %v121 = vlog2.pop %v115
    %v122 = vmul.f32 %v121, 0.6931472
    %v123 = vsub.f32 %v120, %v122
    %vm124 = vcmask 7168
    %125 = vst.msk [vmem:[%s5] sm:$0xff] %vm124, %v123
    %v126 = vsel %vm110, 1, 0
    %v127 = vcvt.s32.f32 %v126
    %v128 = vpack.c.bf16 %v127, %v127
    %v129 = vld [vmem:[%s3] sm:$0xf]
    %v130 = vld [vmem:[%s3 + $0x4] sm:$0xf]
    %v131 = vld [vmem:[%s3 + $0x8] sm:$0xf]
    %v132 = vld [vmem:[%s3 + $0xc] sm:$0xf]
    %v133 = vld [vmem:[%s3 + $0x10] sm:$0xf]
    %v134 = vld [vmem:[%s3 + $0x14] sm:$0xf]
    %v135 = vld [vmem:[%s3 + $0x18] sm:$0xf]
    %v136 = vld [vmem:[%s3 + $0x1c] sm:$0xf]
    %v137 = vld [vmem:[%s3 + $0x20] sm:$0xf]
    %v138 = vld [vmem:[%s3 + $0x24] sm:$0xf]
    %v139 = vld [vmem:[%s3 + $0x28] sm:$0xf]
    %v140 = vld [vmem:[%s3 + $0x2c] sm:$0xf]
    %v141 = vld [vmem:[%s3 + $0x30] sm:$0xf]
    %v142 = vld [vmem:[%s3 + $0x34] sm:$0xf]
    %v143 = vld [vmem:[%s3 + $0x38] sm:$0xf]
    %v144 = vld [vmem:[%s3 + $0x3c] sm:$0xf]
    %v161 = vunpack.c.l.b16 %v129
    %v162 = vunpack.c.l.b16 %v130
    %v163 = vunpack.c.l.b16 %v131
    %v164 = vunpack.c.l.b16 %v132
    %v165 = vunpack.c.l.b16 %v133
    %v166 = vunpack.c.l.b16 %v134
    %v167 = vunpack.c.l.b16 %v135
    %v168 = vunpack.c.l.b16 %v136
    %v169 = vunpack.c.l.b16 %v137
    %v170 = vunpack.c.l.b16 %v138
    %v171 = vunpack.c.l.b16 %v139
    %v172 = vunpack.c.l.b16 %v140
    %v173 = vunpack.c.l.b16 %v141
    %v174 = vunpack.c.l.b16 %v142
    %v175 = vunpack.c.l.b16 %v143
    %v176 = vunpack.c.l.b16 %v144
    %v177 = vpack.c.b16 %v162, %v161
    %v178 = vpack.c.b16 %v164, %v163
    %v179 = vpack.c.b16 %v166, %v165
    %v180 = vpack.c.b16 %v168, %v167
    %v181 = vpack.c.b16 %v170, %v169
    %v182 = vpack.c.b16 %v172, %v171
    %v183 = vpack.c.b16 %v174, %v173
    %v184 = vpack.c.b16 %v176, %v175
    %193 = vmatprep.subr.bf16.mxu0 0
    %194 = vmatpush1.bf16.msra.mxu0 %v177
    %195 = vmatprep.subr.bf16.mxu0 0
    %196 = vmatpush1.bf16.msra.mxu0 %v178
    %197 = vmatprep.subr.bf16.mxu0 0
    %198 = vmatpush1.bf16.msra.mxu0 %v179
    %199 = vmatprep.subr.bf16.mxu0 0
    %200 = vmatpush1.bf16.msra.mxu0 %v180
    %201 = vmatprep.subr.bf16.mxu0 0
    %202 = vmatpush1.bf16.msra.mxu0 %v181
    %203 = vmatprep.subr.bf16.mxu0 0
    %204 = vmatpush1.bf16.msra.mxu0 %v182
    %205 = vmatprep.subr.bf16.mxu0 0
    %206 = vmatpush1.bf16.msra.mxu0 %v183
    %207 = vmatprep.subr.bf16.mxu0 0
    %208 = vmatpush1.bf16.msra.mxu0 %v184
    %209 = vmatprep.subr.bf16.mxu0 0
    %210 = vmatpush1.bf16.msra.mxu0 0
    %211 = vmatprep.subr.bf16.mxu0 0
    %212 = vmatpush1.bf16.msra.mxu0 0
    %213 = vmatprep.subr.bf16.mxu0 0
    %214 = vmatpush1.bf16.msra.mxu0 0
    %215 = vmatprep.subr.bf16.mxu0 0
    %216 = vmatpush1.bf16.msra.mxu0 0
    %217 = vmatprep.subr.bf16.mxu0 0
    %218 = vmatpush1.bf16.msra.mxu0 0
    %219 = vmatprep.subr.bf16.mxu0 0
    %220 = vmatpush1.bf16.msra.mxu0 0
    %221 = vmatprep.subr.bf16.mxu0 0
    %222 = vmatpush1.bf16.msra.mxu0 0
    %223 = vmatprep.subr.bf16.mxu0 0
    %224 = vmatpush1.bf16.msra.mxu0 0
    %225 = vmatprep.mubr.bf16.mxu0 0
    %226 = vmatmul.mubr.bf16.gmra.mrb[0].mxu0 %v128
    %v227 = vpop.f32.mrb[0].mxu0
    %v228 = vadd.f32 0.0, %v227
    %v229 = vpop.f32.mrb[0].mxu0
    %v230 = vpop.f32.mrb[0].mxu0
    %v231 = vpop.f32.mrb[0].mxu0
    %232 = vdwg.mxu0
    %v233 = vpack.c.bf16 %v228, %v228
    %vm234 = vcmask 257024
    %235 = vst.msk [vmem:[#allocation2] sm:$0xf] %vm234, %v233
    // Predicated region
    $region18: #{tpu_custom_call.1} parent=1 // pred_check
      _
    $region19: #{tpu_custom_call.1} parent=1 // pred_check_branch
      %237 = sbr.rel (0) target = $region21
    $region20: #{tpu_custom_call.1} parent=1 // pred_region
      %s239 = ssub.s32 64, 64
      %240 = vsyncadd [#allocation3], %s239
      %s242 = sshll.u32 [#allocation2], 4
      %s243 = int_to_ptr.vmem [resolvable:$true] %s242
      %245 = dma.vmem_to_hbm [thread:$0]  %s243, 64, %s4, [#allocation3]
    $region21: #{tpu_custom_call.1} parent=1 // pred_fallthru
      _
    // Predicated region
    $region22: #{tpu_custom_call.1} parent=1 // pred_check
      _
    $region23: #{tpu_custom_call.1} parent=1 // pred_check_branch
      %247 = sbr.rel (0) target = $region25
    $region24: #{tpu_custom_call.1} parent=1 // pred_region
      _
    $region25: #{tpu_custom_call.1} parent=1 // pred_fallthru
      _
    // Predicated region
    $region26: #{tpu_custom_call.1} parent=1 // pred_check
      _
    $region27: #{tpu_custom_call.1} parent=1 // pred_check_branch
      %249 = sbr.rel (0) target = $region29
    $region28: #{tpu_custom_call.1} parent=1 // pred_region
      %250 = dma.done [#allocation3], 64
    $region29: #{tpu_custom_call.1} parent=1 // pred_fallthru
      _
    // Predicated region
    $region30: #{tpu_custom_call.1} parent=1 // pred_check
      _
    $region31: #{tpu_custom_call.1} parent=1 // pred_check_branch
      %252 = sbr.rel (0) target = $region33
    $region32: #{tpu_custom_call.1} parent=1 // pred_region
      _
    $region33: #{tpu_custom_call.1} parent=1 // pred_fallthru
      _
    %253 = vsyncpa [#allocation3], 1

</llo_original>
